<compile_context>
chip_gen: v7x
topology: tpu7x:2x2x1
jax: 0.10.0
libtpu: 0.0.40
codegen_flags: <defaults>
</compile_context>

<pallas_src>
import jax
import jax.numpy as jnp
from jax.experimental import pallas as pl
from jax.experimental.pallas import tpu as pltpu


# -----------------------------------------------------------------------------
# Parameter setup (matches PositionalEncoding.__init__; plain-JAX glue).
# -----------------------------------------------------------------------------
def make_pe_table(d_model: int, maxlen: int = 5000) -> jnp.ndarray:
    position = jnp.arange(maxlen, dtype=jnp.float32)[:, None]                       # (maxlen, 1)
    div_term = 10000.0 ** (jnp.arange(0, d_model, 2, dtype=jnp.float32) / d_model)  # (ceil(d/2),)
    angles = position / div_term[None, :]                                           # (maxlen, ceil(d/2))
    pe = jnp.zeros((1, maxlen, d_model), dtype=jnp.float32)
    pe = pe.at[0, :, 0::2].set(jnp.sin(angles))
    pe = pe.at[0, :, 1::2].set(jnp.cos(angles)[:, : d_model // 2])  # safe for odd d_model
    return pe


# -----------------------------------------------------------------------------
# Kernel 1: standalone positional-encoding add.
# -----------------------------------------------------------------------------
def _pe_add_kernel(x_ref, pe_ref, o_ref):
    # (1, tS, D) blocks; add in f32 (exact vs. the PyTorch reference), cast on store.
    o_ref[...] = (x_ref[...].astype(jnp.float32)
                  + pe_ref[...].astype(jnp.float32)).astype(o_ref.dtype)


def _choose_seq_tile(S: int, D: int, itemsize: int, max_bytes: int) -> int:
    # Largest multiple-of-8 divisor of S whose (tS, D) block fits the budget.
    if S * D * itemsize <= max_bytes or S % 8 != 0:
        return S
    best = 8  # floor: 8 sublanes even if it exceeds the (advisory) budget
    t = 8
    while t <= S:
        if S % t == 0 and t * D * itemsize <= max_bytes:
            best = t
        t += 8
    return best


def add_positional_encoding(x: jnp.ndarray, pe: jnp.ndarray,
                            max_block_bytes: int = 6 << 20,
                            donate_x: bool = False) -> jnp.ndarray:
    """x: (B, S, D); pe: (1, maxlen, D) f32. Returns x + pe[:, :S, :] in x.dtype.

    If donate_x=True the output aliases x's buffer (callers must not reuse x).
    NOTE: on the fused layer-0 path prefer qkv_projection_with_pe and skip this.
    """
    B, S, D = x.shape
    assert pe.shape[-1] == D and pe.shape[1] >= S

    # No wrapper-side slice/convert: window the full table via the index_map.
    # Only slice when S is not sublane-aligned (block must then equal full dims).
    pe_in = pe if S % 8 == 0 else pe[:, :S, :]

    tS = _choose_seq_tile(S, D, x.dtype.itemsize, max_block_bytes)
    # pe block is f32 in VMEM, x/out blocks are x.dtype.
    block_bytes = tS * D * (2 * x.dtype.itemsize + 4)
    grid = (S // tS, B)                              # seq tiles outer, batch inner

    return pl.pallas_call(
        _pe_add_kernel,
        out_shape=jax.ShapeDtypeStruct((B, S, D), x.dtype),
        grid=grid,
        in_specs=[
            pl.BlockSpec((1, tS, D), lambda s, b: (b, s, 0)),   # x
            pl.BlockSpec((1, tS, D), lambda s, b: (0, s, 0)),   # pe: resident across b
        ],
        out_specs=pl.BlockSpec((1, tS, D), lambda s, b: (b, s, 0)),
        input_output_aliases=({0: 0} if donate_x else {}),
        compiler_params=pltpu.CompilerParams(
            dimension_semantics=("parallel", "parallel"),
            vmem_limit_bytes=int(min(32 << 20, max(16 << 20, 6 * block_bytes))),
        ),
    )(x, pe_in)


# -----------------------------------------------------------------------------
# Kernel 2: PE add fused into the first decoder cell's combined QKV projection.
#           (x + pe) @ [Wq|Wk|Wv] + b, bf16 MXU operands, f32 accumulation,
#           no k axis: the (D, tn) weight slab is resident across the row loop.
# -----------------------------------------------------------------------------
def _qkv_pe_kernel(x_ref, pe_ref, w_ref, b_ref, o_ref):
    # Fused PE add rides in otherwise-idle VPU slots under the MXU.
    a = x_ref[...] + pe_ref[...].astype(x_ref.dtype)
    acc = jnp.dot(a, w_ref[...], preferred_element_type=jnp.float32)
    o_ref[...] = (acc + b_ref[...]).astype(o_ref.dtype)


def _choose_tn(N: int, D: int, itemsize: int, w_budget: int) -> int:
    # Largest 128-aligned divisor of N whose (D, tn) weight slab fits w_budget.
    # Falls back to the full dim when N is not 128-aligned (small models).
    if N % 128 != 0:
        return N
    best = 128
    t = 128
    while t <= N:
        if N % t == 0 and D * t * itemsize <= w_budget:
            best = t
        t += 128
    return best


def _choose_tm(S: int, D: int, tn: int, in_isz: int, out_isz: int, budget: int) -> int:
    # Largest multiple-of-8 divisor of S (cap 512) whose double-buffered block set
    # (x bf16 + pe f32 + W + out + bias) fits the VMEM budget.  tm | S keeps the
    # pe index_map exact (row blocks never straddle a batch boundary).
    if S % 8 != 0:
        return S

    def footprint(tm):
        return 2 * (tm * D * (in_isz + 4) + D * tn * in_isz + tm * tn * out_isz + tn * 4)

    best = 8
    t = 8
    while t <= min(S, 512):
        if S % t == 0 and footprint(t) <= budget:
            best = t
        t += 8
    return best


def qkv_projection_with_pe(x, pe, w_qkv, b_qkv,
                           compute_dtype=jnp.bfloat16,
                           vmem_block_budget: int = 24 << 20):
    """Fused front of the first DecoderCell: (x + pe[:, :S, :]) @ [Wq|Wk|Wv] + b.

    x: (B, S, D); pe: (1, maxlen, D) f32; w_qkv: (D, N); b_qkv: (N,). Returns (B, S, N)
    in x.dtype. MXU operands are cast to `compute_dtype` (bf16 by default);
    accumulation and the bias add stay in f32.
    """
    B, S, D = x.shape
    K, N = w_qkv.shape
    assert K == D and pe.shape[-1] == D and pe.shape[1] >= S
    M = B * S

    cdt = jnp.dtype(compute_dtype) if compute_dtype is not None else x.dtype
    x2d = x.reshape(M, D).astype(cdt)                  # bf16 MXU operand, half HBM
    w2d = w_qkv.astype(cdt)
    b2d = b_qkv.reshape(1, N).astype(jnp.float32)      # bias stays f32 (exact add)
    pe2d = pe[0]                                       # (maxlen, D) f32; no slice/convert
    if S % 8 != 0:                                     # block must equal full dims then
        pe2d = pe2d[:S, :]

    in_isz = cdt.itemsize
    out_isz = x.dtype.itemsize
    tn = _choose_tn(N, D, in_isz, w_budget=4 << 20)
    tm = _choose_tm(S, D, tn, in_isz, out_isz, budget=vmem_block_budget)
    pe_blocks = S // tm
    footprint = 2 * (tm * D * (in_isz + 4) + D * tn * in_isz + tm * tn * out_isz + tn * 4)
    vmem_limit = int(min(32 << 20, max(16 << 20, footprint + (4 << 20))))

    # j (N tiles) outermost: the (D, tn) weight slab is DMA'd once per j and stays
    # resident across the inner row loop.  No reduction axis -> no acc scratch.
    grid = (N // tn, M // tm)

    out2d = pl.pallas_call(
        _qkv_pe_kernel,
        out_shape=jax.ShapeDtypeStruct((M, N), x.dtype),
        grid=grid,
        in_specs=[
            pl.BlockSpec((tm, D), lambda j, i: (i, 0)),               # x rows
            pl.BlockSpec((tm, D), lambda j, i: (i % pe_blocks, 0)),   # pe rows (repeat / batch)
            pl.BlockSpec((D, tn), lambda j, i: (0, j)),               # W slab: resident over i
            pl.BlockSpec((1, tn), lambda j, i: (0, j)),               # bias
        ],
        out_specs=pl.BlockSpec((tm, tn), lambda j, i: (i, j)),
        compiler_params=pltpu.CompilerParams(
            dimension_semantics=("parallel", "parallel"),
            vmem_limit_bytes=vmem_limit,
        ),
    )(x2d, pe2d, w2d, b2d)

    return out2d.reshape(B, S, N)


# -----------------------------------------------------------------------------
# Self-test
# -----------------------------------------------------------------------------
if __name__ == "__main__":
    # ---- Config 1: small shapes consistent with the module (batch=2, seq=8, d_model=32) ----
    B, S, D = 2, 8, 32
    N = 3 * D  # concatenated [Wq | Wk | Wv] output width (n_head=4, d_keys=d_values=8)
    key = jax.random.PRNGKey(0)
    kx, kw, kb, kx2, kw2, kb2 = jax.random.split(key, 6)

    x = jax.random.normal(kx, (B, S, D), dtype=jnp.float32)
    w_qkv = jax.random.normal(kw, (D, N), dtype=jnp.float32) * (1.0 / D ** 0.5)
    b_qkv = jax.random.normal(kb, (N,), dtype=jnp.float32)
    pe = make_pe_table(D, maxlen=5000)

    ref_z = x + pe[:, :S, :]
    ref_qkv = jnp.einsum("bsd,dn->bsn", ref_z, w_qkv,
                         precision=jax.lax.Precision.HIGHEST) + b_qkv

    qkv = jax.block_until_ready(qkv_projection_with_pe(x, pe, w_qkv, b_qkv))
    assert qkv.shape == (B, S, N)
    # bf16 MXU operands -> widened tolerance vs. the f32 reference.
    assert jnp.allclose(qkv, ref_qkv, atol=3e-2, rtol=3e-2), "fused QKV projection mismatch"

    z = jax.block_until_ready(add_positional_encoding(x, pe))
    assert z.shape == (B, S, D)
    assert jnp.allclose(z, ref_z, atol=1e-6), "positional-encoding add mismatch"

    # ---- Config 2: exercise the real multi-tile path (128-aligned D, seq tiling,
    #      resident weight slab) with a tiny forced block budget for kernel 1 ----
    B2, S2, D2 = 2, 32, 384
    N2 = 3 * D2
    x2 = jax.random.normal(kx2, (B2, S2, D2), dtype=jnp.float32)
    w2 = jax.random.normal(kw2, (D2, N2), dtype=jnp.float32) * (1.0 / D2 ** 0.5)
    b2 = jax.random.normal(kb2, (N2,), dtype=jnp.float32)
    pe2 = make_pe_table(D2, maxlen=64)

    ref_z2 = x2 + pe2[:, :S2, :]
    ref_qkv2 = jnp.einsum("bsd,dn->bsn", ref_z2, w2,
                          precision=jax.lax.Precision.HIGHEST) + b2

    qkv2 = jax.block_until_ready(qkv_projection_with_pe(x2, pe2, w2, b2))
    assert jnp.allclose(qkv2, ref_qkv2, atol=6e-2, rtol=6e-2), "fused QKV (tiled) mismatch"

    z2 = jax.block_until_ready(
        add_positional_encoding(x2, pe2, max_block_bytes=4096))  # force seq tiling
    assert jnp.allclose(z2, ref_z2, atol=1e-6), "positional-encoding add (tiled) mismatch"

    print("KERNEL_OK")
</pallas_src>

<mosaic_0001>
module attributes {stable_mosaic.version = 11 : i64} {
  func.func @_qkv_pe_kernel(%arg0: i32, %arg1: i32, %arg2: memref<8x32xbf16, #tpu.memory_space<vmem>>, %arg3: memref<8x32xf32, #tpu.memory_space<vmem>>, %arg4: memref<32x96xbf16, #tpu.memory_space<vmem>>, %arg5: memref<1x96xf32, #tpu.memory_space<vmem>>, %arg6: memref<8x96xf32, #tpu.memory_space<vmem>>) attributes {dimension_semantics = [#tpu.dimension_semantics<parallel>, #tpu.dimension_semantics<parallel>], iteration_bounds = array<i64: 1, 2>, scalar_prefetch = 0 : i64, scratch_operands = 0 : i64, tpu.core_type = #tpu.core_type<tc>, window_params = [{transform_indices = @transform_0, window_bounds = array<i64: 8, 32>}, {transform_indices = @transform_1, window_bounds = array<i64: 8, 32>}, {transform_indices = @transform_2, window_bounds = array<i64: 32, 96>}, {transform_indices = @transform_3, window_bounds = array<i64: 1, 96>}, {transform_indices = @transform_4, window_bounds = array<i64: 8, 96>}]} {
    %c0 = arith.constant 0 : index
    %c0_0 = arith.constant 0 : index
    %0 = vector.load %arg2[%c0, %c0_0] : memref<8x32xbf16, #tpu.memory_space<vmem>>, vector<8x32xbf16>
    %c0_1 = arith.constant 0 : index
    %c0_2 = arith.constant 0 : index
    %1 = vector.load %arg3[%c0_1, %c0_2] : memref<8x32xf32, #tpu.memory_space<vmem>>, vector<8x32xf32>
    %2 = arith.truncf %1 : vector<8x32xf32> to vector<8x32xbf16>
    %3 = arith.addf %0, %2 : vector<8x32xbf16>
    %c0_3 = arith.constant 0 : index
    %c0_4 = arith.constant 0 : index
    %4 = vector.load %arg4[%c0_3, %c0_4] : memref<32x96xbf16, #tpu.memory_space<vmem>>, vector<32x96xbf16>
    %cst = arith.constant dense<0.000000e+00> : vector<8x96xf32>
    %5 = tpu.matmul %3, %4, %cst {dimension_numbers = #tpu.dot_dimension_numbers<[1], [0], [0], [1], [0, 0, 1, 1], [], []>} : vector<8x32xbf16>, vector<32x96xbf16>, vector<8x96xf32> -> vector<8x96xf32>
    %c0_5 = arith.constant 0 : index
    %c0_6 = arith.constant 0 : index
    %6 = vector.load %arg5[%c0_5, %c0_6] : memref<1x96xf32, #tpu.memory_space<vmem>>, vector<1x96xf32>
    %7 = vector.broadcast %6 : vector<1x96xf32> to vector<8x96xf32>
    %8 = arith.addf %5, %7 : vector<8x96xf32>
    %c0_7 = arith.constant 0 : index
    %c0_8 = arith.constant 0 : index
    %9 = vector.load %arg6[%c0_7, %c0_8] : memref<8x96xf32, #tpu.memory_space<vmem>>, vector<8x96xf32>
    tpu.vector_store %arg6[%c0_7, %c0_8], %8 {strides = array<i32>} : memref<8x96xf32, #tpu.memory_space<vmem>>, vector<8x96xf32>,
    return
  }
  func.func @transform_0(%arg0: i32, %arg1: i32) -> (i32, i32) {
    %c0_i32 = arith.constant 0 : i32
    %c0_i32_0 = arith.constant 0 : i32
    return %arg1, %c0_i32 : i32, i32
  }
  func.func @transform_1(%arg0: i32, %arg1: i32) -> (i32, i32) {
    %c1_i32 = arith.constant 1 : i32
    %c0_i32 = arith.constant 0 : i32
    %0 = arith.cmpi eq, %c1_i32, %c0_i32 : i32
    %c1_i32_0 = arith.constant 1 : i32
    %1 = arith.select %0, %c1_i32_0, %c1_i32 : i32
    %2 = arith.remsi %arg1, %1 : i32
    %c0_i32_1 = arith.constant 0 : i32
    %3 = arith.cmpi ne, %2, %c0_i32_1 : i32
    %c0_i32_2 = arith.constant 0 : i32
    %4 = arith.cmpi slt, %2, %c0_i32_2 : i32
    %c0_i32_3 = arith.constant 0 : i32
    %5 = arith.cmpi slt, %1, %c0_i32_3 : i32
    %6 = arith.xori %4, %5 : i1
    %7 = arith.andi %6, %3 : i1
    %8 = arith.addi %2, %1 : i32
    %9 = arith.select %7, %8, %2 : i32
    %c0_i32_4 = arith.constant 0 : i32
    %c0_i32_5 = arith.constant 0 : i32
    return %9, %c0_i32_4 : i32, i32
  }
  func.func @transform_2(%arg0: i32, %arg1: i32) -> (i32, i32) {
    %c0_i32 = arith.constant 0 : i32
    %c0_i32_0 = arith.constant 0 : i32
    return %c0_i32, %arg0 : i32, i32
  }
  func.func @transform_3(%arg0: i32, %arg1: i32) -> (i32, i32) {
    %c0_i32 = arith.constant 0 : i32
    %c0_i32_0 = arith.constant 0 : i32
    return %c0_i32, %arg0 : i32, i32
  }
  func.func @transform_4(%arg0: i32, %arg1: i32) -> (i32, i32) {
    %c0_i32 = arith.constant 0 : i32
    return %arg1, %arg0 : i32, i32
  }
}

</mosaic_0001>

<llo_original>
// kernel: tpu_custom_call.1
$region0: #{tpu_custom_call.1}
  #allocation0 [shape = 'u32[]', space=smem, size = 0x4, offset = 0x4, fixed_abs, tag = 'smem constant byte address 0x4 - core index']
  #allocation1 [shape = 'u32[144,128]{1,0:T(1,128)}', space=vmem, size = 0x12000, scoped, tag = 'internal scratch']
  %s0 = inlined_call_operand.vmem [shape: bf16[16,32], index: 0, kind: input, shape index: {}]
  %s1 = inlined_call_operand.vmem [shape: f32[5000,32], index: 1, kind: input, shape index: {}]
  %s2 = inlined_call_operand.vmem [shape: bf16[32,96], index: 2, kind: input, shape index: {}]
  %s3 = inlined_call_operand.vmem [shape: f32[1,96], index: 3, kind: input, shape index: {}]
  %s4 = inlined_call_operand.hbm [shape: f32[16,96], index: 4, kind: output, shape index: {}]
  %s5 = sld [smem:[#allocation0]]
  $region49: #{tpu_custom_call.1} parent=0
    _
  %s7 = ssub.s32 1, %s5
  %s8 = scalar_select 0, %s7, %s5
  $region1: #{tpu_custom_call.1} parent=0
    #allocation2 [shape = 'u8[8192]{0}', space=vmem, size = 0x2000, scoped, tag = 'output window, operand 0']
    #allocation3 [shape = 's32[2]{0}', space=sflag, size = 0x8, scoped, tag = 'scoped memory for tpu_custom_call.1']
    %9 = vsyncpa [#allocation3], 0
    %s10 = scalar_lea.sflag [#allocation3], 1
    %11 = vsyncpa %s10, 0
    loop: start=0, step=1, limit=4
    $region2: #{tpu_custom_call.1} parent=1 // loop_pre_header
      _
    $region3: #{tpu_custom_call.1} parent=1 // loop_header
      %s13 = sphi 0, %s17
      %p14 = scmp.ge.s32.totalorder %s13, 4
      %s20 = sphi 0, %s32
      %s21 = sphi 0, %s28
      %s22 = sphi 0, %s20
      %s23 = sphi 0, %s21
      %s24 = sphi 0, %s22
      %s25 = sphi 0, %s23
      %s35 = sphi 0, %s37
      %s38 = sphi 0, %s35
      %s39 = sphi 0, %s38
      %s55 = sphi 0, %s39
      %s59 = sphi 0, %s59
      %s61 = sphi 0, %s59
      %s62 = sphi 0, %s61
      %s76 = sphi 0, %s62
      %s82 = sphi 0, %s84
      %s85 = sphi 0, %s82
      %s86 = sphi 0, %s85
      %s102 = sphi 0, %s86
      %s108 = sphi 0, %s110
      %s111 = sphi 0, %s108
      %s112 = sphi 0, %s111
      %s128 = sphi 0, %s112
      %s136 = sphi 0, %s138
      %s139 = sphi 0, %s136
      %s140 = sphi 0, %s139
      %s156 = sphi 0, %s140
    $region4: #{tpu_custom_call.1} parent=1 // loop_header_branch
      %16 = sbr.rel (%p14) target = $region8
    $region5: #{tpu_custom_call.1} parent=1 // loop_body
      %s18 = ssub.s32 %s13, 1
      %s19 = ssub.s32 %s13, 2
      %s26 = sadd.s32 1, %s21
      %p27 = scmp.ge.s32.totalorder %s26, 2
      %s28 = scalar_select %p27, 0, %s26
      %s29 = sadd.s32 1, %s20
      %s30 = scalar_select %p27, %s29, %s20
      %p31 = scmp.ge.s32.totalorder %s30, 1
      %s32 = scalar_select %p31, 0, %s30
      %s33 = ssub.s32 %s21, %s28
      %p34 = scmp.eq.s32.totalorder %s33, 0
      %s36 = sadd.s32 %s35, 1
      %s37 = scalar_select %p34, %s35, %s36
      %p40 = pneg %p34
      %p41 = scmp.eq.s32.totalorder %s13, 1
      %p42 = por %p40, %p41
      %p43 = scmp.ne.s32.totalorder %s35, %s38
      %p44 = scmp.eq.s32.totalorder %s13, 0
      %p45 = por %p43, %p44
      %p46 = scmp.ne.s32.totalorder %s35, %s38
      %p47 = scmp.eq.s32.totalorder %s18, 1
      %p48 = por %p46, %p47
      %p49 = scmp.ne.s32.totalorder %s38, %s39
      %p50 = scmp.eq.s32.totalorder %s18, 0
      %p51 = por %p49, %p50
      %p52 = scmp.ne.s32.totalorder %s38, %s39
      %p53 = scmp.eq.s32.totalorder %s19, 1
      %p54 = por %p52, %p53
      %p56 = scmp.ne.s32.totalorder %s39, %s55
      %p57 = scmp.eq.s32.totalorder %s19, 0
      %p58 = por %p56, %p57
      %s60 = sadd.s32 %s59, 1
      %p63 = scmp.eq.s32.totalorder %s13, 1
      %p64 = scmp.ne.s32.totalorder %s59, %s61
      %p65 = scmp.eq.s32.totalorder %s13, 0
      %p66 = por %p64, %p65
      %p67 = scmp.ne.s32.totalorder %s59, %s61
      %p68 = scmp.eq.s32.totalorder %s18, 1
      %p69 = por %p67, %p68
      %p70 = scmp.ne.s32.totalorder %s61, %s62
      %p71 = scmp.eq.s32.totalorder %s18, 0
      %p72 = por %p70, %p71
      %p73 = scmp.ne.s32.totalorder %s61, %s62
      %p74 = scmp.eq.s32.totalorder %s19, 1
      %p75 = por %p73, %p74
      %p77 = scmp.ne.s32.totalorder %s62, %s76
      %p78 = scmp.eq.s32.totalorder %s19, 0
      %p79 = por %p77, %p78
      %s80 = ssub.s32 %s20, %s32
      %p81 = scmp.eq.s32.totalorder %s80, 0
      %s83 = sadd.s32 %s82, 1
      %s84 = scalar_select %p81, %s82, %s83
      %p87 = pneg %p81
      %p88 = scmp.eq.s32.totalorder %s13, 1
      %p89 = por %p87, %p88
      %p90 = scmp.ne.s32.totalorder %s82, %s85
      %p91 = scmp.eq.s32.totalorder %s13, 0
      %p92 = por %p90, %p91
      %p93 = scmp.ne.s32.totalorder %s82, %s85
      %p94 = scmp.eq.s32.totalorder %s18, 1
      %p95 = por %p93, %p94
      %p96 = scmp.ne.s32.totalorder %s85, %s86
      %p97 = scmp.eq.s32.totalorder %s18, 0
      %p98 = por %p96, %p97
      %p99 = scmp.ne.s32.totalorder %s85, %s86
      %p100 = scmp.eq.s32.totalorder %s19, 1
      %p101 = por %p99, %p100
      %p103 = scmp.ne.s32.totalorder %s86, %s102
      %p104 = scmp.eq.s32.totalorder %s19, 0
      %p105 = por %p103, %p104
      %s106 = ssub.s32 %s20, %s32
      %p107 = scmp.eq.s32.totalorder %s106, 0
      %s109 = sadd.s32 %s108, 1
      %s110 = scalar_select %p107, %s108, %s109
      %p113 = pneg %p107
      %p114 = scmp.eq.s32.totalorder %s13, 1
      %p115 = por %p113, %p114
      %p116 = scmp.ne.s32.totalorder %s108, %s111
      %p117 = scmp.eq.s32.totalorder %s13, 0
      %p118 = por %p116, %p117
      %p119 = scmp.ne.s32.totalorder %s108, %s111
      %p120 = scmp.eq.s32.totalorder %s18, 1
      %p121 = por %p119, %p120
      %p122 = scmp.ne.s32.totalorder %s111, %s112
      %p123 = scmp.eq.s32.totalorder %s18, 0
      %p124 = por %p122, %p123
      %p125 = scmp.ne.s32.totalorder %s111, %s112
      %p126 = scmp.eq.s32.totalorder %s19, 1
      %p127 = por %p125, %p126
      %p129 = scmp.ne.s32.totalorder %s112, %s128
      %p130 = scmp.eq.s32.totalorder %s19, 0
      %p131 = por %p129, %p130
      %s132 = ssub.s32 %s21, %s28
      %s133 = ssub.s32 %s20, %s32
      %s134 = sor.u32 %s132, %s133
      %p135 = scmp.eq.s32.totalorder %s134, 0
      %s137 = sadd.s32 %s136, 1
      %s138 = scalar_select %p135, %s136, %s137
      %p141 = pneg %p135
      %p142 = scmp.eq.s32.totalorder %s13, 1
      %p143 = por %p141, %p142
      %p144 = scmp.ne.s32.totalorder %s136, %s139
      %p145 = scmp.eq.s32.totalorder %s13, 0
      %p146 = por %p144, %p145
      %p147 = scmp.ne.s32.totalorder %s136, %s139
      %p148 = scmp.eq.s32.totalorder %s18, 1
      %p149 = por %p147, %p148
      %p150 = scmp.ne.s32.totalorder %s139, %s140
      %p151 = scmp.eq.s32.totalorder %s18, 0
      %p152 = por %p150, %p151
      %p153 = scmp.ne.s32.totalorder %s139, %s140
      %p154 = scmp.eq.s32.totalorder %s19, 1
      %p155 = por %p153, %p154
      %p157 = scmp.ne.s32.totalorder %s140, %s156
      %p158 = scmp.eq.s32.totalorder %s19, 0
      %p159 = por %p157, %p158
      %p160 = scmp.le.s32.totalorder 1, %s13
      %p161 = scmp.lt.s32.totalorder %s13, 3
      %p162 = pnand %p160, %p161
      %p163 = pneg %p162
      // Predicated region
      $region9: #{tpu_custom_call.1} parent=5 // pred_check
        _
      $region10: #{tpu_custom_call.1} parent=5 // pred_check_branch
        %165 = sbr.rel (%p162) target = $region12
      $region11: #{tpu_custom_call.1} parent=5 // pred_region
        %s166 = ssub.s32 %s13, 1
        // Predicated region
        $region13: #{tpu_custom_call.1} parent=11 // pred_check
          %p167 = pneg %p72
        $region14: #{tpu_custom_call.1} parent=11 // pred_check_branch
          %169 = sbr.rel (%p167) target = $region16
        $region15: #{tpu_custom_call.1} parent=11 // pred_region
          _
        $region16: #{tpu_custom_call.1} parent=11 // pred_fallthru
          _
        // Predicated region
        $region17: #{tpu_custom_call.1} parent=11 // pred_check
          %p170 = pneg %p98
        $region18: #{tpu_custom_call.1} parent=11 // pred_check_branch
          %172 = sbr.rel (%p170) target = $region20
        $region19: #{tpu_custom_call.1} parent=11 // pred_region
          %p173 = scmp.lt.s32.totalorder %s22, 0
          %s174 = scalar_select %p173, %s22, 0
          %s175 = smul.addr %s174, 4
          %s176 = scalar_lea.vmem %s2, %s175
        $region20: #{tpu_custom_call.1} parent=11 // pred_fallthru
          _
        // Predicated region
        $region21: #{tpu_custom_call.1} parent=11 // pred_check
          %p177 = pneg %p124
        $region22: #{tpu_custom_call.1} parent=11 // pred_check_branch
          %179 = sbr.rel (%p177) target = $region24
        $region23: #{tpu_custom_call.1} parent=11 // pred_region
          %p180 = scmp.lt.s32.totalorder %s22, 0
          %s181 = scalar_select %p180, %s22, 0
          %s182 = scalar_lea.vmem %s3, %s181
        $region24: #{tpu_custom_call.1} parent=11 // pred_fallthru
          _
      $region12: #{tpu_custom_call.1} parent=5 // pred_fallthru
        _
      %p183 = scmp.lt.s32.totalorder %s13, 2
      // Predicated region
      $region25: #{tpu_custom_call.1} parent=5 // pred_check
        %p184 = pneg %p183
      $region26: #{tpu_custom_call.1} parent=5 // pred_check_branch
        %186 = sbr.rel (%p184) target = $region28
      $region27: #{tpu_custom_call.1} parent=5 // pred_region
        // Predicated region
        $region29: #{tpu_custom_call.1} parent=27 // pred_check
          %p187 = pneg %p45
        $region30: #{tpu_custom_call.1} parent=27 // pred_check_branch
          %189 = sbr.rel (%p187) target = $region32
        $region31: #{tpu_custom_call.1} parent=27 // pred_region
          %p190 = scmp.lt.s32.totalorder %s21, 1
          %s191 = scalar_select %p190, %s21, 1
          %s192 = smul.addr %s191, 4
          %s193 = scalar_lea.vmem %s0, %s192
        $region32: #{tpu_custom_call.1} parent=27 // pred_fallthru
          _
      $region28: #{tpu_custom_call.1} parent=5 // pred_fallthru
        _
      %p194 = scmp.le.s32.totalorder 1, %s13
      %p195 = scmp.lt.s32.totalorder %s13, 3
      %p196 = pnand %p194, %p195
      %p197 = pneg %p196
      // Predicated region
      $region33: #{tpu_custom_call.1} parent=5 // pred_check
        _
      $region34: #{tpu_custom_call.1} parent=5 // pred_check_branch
        %199 = sbr.rel (%p196) target = $region36
      $region35: #{tpu_custom_call.1} parent=5 // pred_region
        %s200 = ssub.s32 %s13, 1
        %p201 = scmp.lt.s32.totalorder %s23, 1
        %s202 = scalar_select %p201, %s23, 1
        %s203 = smul.addr %s202, 4
        %s204 = scalar_lea.vmem %s0, %s203
        %p205 = pneg %p51
        %p206 = pneg %p48
        %p207 = pneg %p72
        %p208 = pneg %p69
        %p209 = scmp.lt.s32.totalorder %s22, 0
        %s210 = scalar_select %p209, %s22, 0
        %s211 = smul.addr %s210, 4
        %s212 = scalar_lea.vmem %s2, %s211
        %p213 = pneg %p98
        %p214 = pneg %p95
        %p215 = scmp.lt.s32.totalorder %s22, 0
        %s216 = scalar_select %p215, %s22, 0
        %s217 = scalar_lea.vmem %s3, %s216
        %p218 = pneg %p124
        %p219 = pneg %p121
        %p220 = pneg %p152
        %p221 = pneg %p149
        %s222 = sand.u32 %s139, 1
        %s223 = scalar_lea.sflag [#allocation3], %s222
        %s224 = sand.u32 %s139, 1
        %s225 = smul.addr %s224, 8
        %s226 = scalar_lea.vmem [#allocation2], %s225
        %p227 = scmp.lt.s32.totalorder %s23, 1
        %s228 = scalar_select %p227, %s23, 1
        %s229 = smul.addr %s228, 4
        %s230 = scalar_lea.vmem %s0, %s229
        %p231 = scmp.lt.s32.totalorder %s22, 0
        %s232 = scalar_select %p231, %s22, 0
        %s233 = smul.addr %s232, 4
        %s234 = scalar_lea.vmem %s2, %s233
        %p235 = scmp.lt.s32.totalorder %s22, 0
        %s236 = scalar_select %p235, %s22, 0
        %s237 = scalar_lea.vmem %s3, %s236
        %v239 = vld [vmem:[%s230] sm:$0xf]
        %v240 = vld [vmem:[%s1] sm:$0xff]
        %v241 = vpack.c.bf16 %v240, %v240
        %v242 = vadd.bf16 %v239, %v241
        %v243 = vld [vmem:[%s234] sm:$0xf]
        %v244 = vld [vmem:[%s234 + $0x4] sm:$0xf]
        %v245 = vld [vmem:[%s234 + $0x8] sm:$0xf]
        %v246 = vld [vmem:[%s234 + $0xc] sm:$0xf]
        %v247 = vld [vmem:[%s237] sm:$0x1]
        %v249 = vlaneseq
        %v250 = vshrl.u32 %v249, 7
        %v251 = vsub.s32 0, %v250
        %v252 = vrot.slane %v247, %v251
        %v258 = vunpack.c.l.b16 %v243
        %v259 = vunpack.c.l.b16 %v244
        %v260 = vunpack.c.l.b16 %v245
        %v261 = vunpack.c.l.b16 %v246
        %v262 = vpack.c.b16 %v259, %v258
        %v263 = vpack.c.b16 %v261, %v260
        %vm266 = vcmask 261120
        %v268 = vsel %vm266, %v242, 0
        %270 = vmatprep.subr.bf16.mxu0 0
        %271 = vmatpush1.bf16.msra.mxu0 %v262
        %272 = vmatprep.subr.bf16.mxu0 0
        %273 = vmatpush1.bf16.msra.mxu0 %v263
        %274 = vmatprep.subr.bf16.mxu0 0
        %275 = vmatpush1.bf16.msra.mxu0 0
        %276 = vmatprep.subr.bf16.mxu0 0
        %277 = vmatpush1.bf16.msra.mxu0 0
        %278 = vmatprep.subr.bf16.mxu0 0
        %279 = vmatpush1.bf16.msra.mxu0 0
        %280 = vmatprep.subr.bf16.mxu0 0
        %281 = vmatpush1.bf16.msra.mxu0 0
        %282 = vmatprep.subr.bf16.mxu0 0
        %283 = vmatpush1.bf16.msra.mxu0 0
        %284 = vmatprep.subr.bf16.mxu0 0
        %285 = vmatpush1.bf16.msra.mxu0 0
        %286 = vmatprep.subr.bf16.mxu0 0
        %287 = vmatpush1.bf16.msra.mxu0 0
        %288 = vmatprep.subr.bf16.mxu0 0
        %289 = vmatpush1.bf16.msra.mxu0 0
        %290 = vmatprep.subr.bf16.mxu0 0
        %291 = vmatpush1.bf16.msra.mxu0 0
        %292 = vmatprep.subr.bf16.mxu0 0
        %293 = vmatpush1.bf16.msra.mxu0 0
        %294 = vmatprep.subr.bf16.mxu0 0
        %295 = vmatpush1.bf16.msra.mxu0 0
        %296 = vmatprep.subr.bf16.mxu0 0
        %297 = vmatpush1.bf16.msra.mxu0 0
        %298 = vmatprep.subr.bf16.mxu0 0
        %299 = vmatpush1.bf16.msra.mxu0 0
        %300 = vmatprep.subr.bf16.mxu0 0
        %301 = vmatpush1.bf16.msra.mxu0 0
        %302 = vmatprep.mubr.bf16.mxu0 0
        %303 = vmatmul.mubr.bf16.gmra.mrb[0].mxu0 %v268
        %v304 = vpop.f32.mrb[0].mxu0
        %v305 = vadd.f32 %v252, %v304
        %v306 = vpop.f32.mrb[0].mxu0
        %v307 = vpop.f32.mrb[0].mxu0
        %v308 = vpop.f32.mrb[0].mxu0
        %309 = vdwg.mxu0
        %vm310 = vcmask 785408
        %311 = vst.msk [vmem:[%s226] sm:$0xff] %vm310, %v305
        %s312 = sand.u32 %s139, 1
        %s313 = scalar_lea.sflag [#allocation3], %s312
        %s314 = sand.u32 %s139, 1
        %s315 = smul.addr %s314, 8
        %s316 = scalar_lea.vmem [#allocation2], %s315
        // Predicated region
        $region37: #{tpu_custom_call.1} parent=35 // pred_check
          %p317 = pneg %p149
        $region38: #{tpu_custom_call.1} parent=35 // pred_check_branch
          %319 = sbr.rel (%p317) target = $region40
        $region39: #{tpu_custom_call.1} parent=35 // pred_region
          %s321 = ssub.s32 128, 128
          %322 = vsyncadd %s313, %s321
          %s323 = sadd.s32 %s22, %s23
          %s324 = smul.addr %s323, 128
          %s325 = scalar_lea.hbm %s4, %s324
          %s327 = sshll.u32 %s316, 4
          %s328 = int_to_ptr.vmem [resolvable:$true] %s327
          %330 = dma.vmem_to_hbm [thread:$0]  %s328, 128, %s325, %s313
        $region40: #{tpu_custom_call.1} parent=35 // pred_fallthru
          _
      $region36: #{tpu_custom_call.1} parent=5 // pred_fallthru
        _
      %p331 = scmp.le.s32.totalorder 2, %s13
      // Predicated region
      $region41: #{tpu_custom_call.1} parent=5 // pred_check
        %p332 = pneg %p331
      $region42: #{tpu_custom_call.1} parent=5 // pred_check_branch
        %334 = sbr.rel (%p332) target = $region44
      $region43: #{tpu_custom_call.1} parent=5 // pred_region
        %s335 = ssub.s32 %s13, 2
        // Predicated region
        $region45: #{tpu_custom_call.1} parent=43 // pred_check
          %p336 = pneg %p155
        $region46: #{tpu_custom_call.1} parent=43 // pred_check_branch
          %338 = sbr.rel (%p336) target = $region48
        $region47: #{tpu_custom_call.1} parent=43 // pred_region
          %s339 = sand.u32 %s140, 1
          %s340 = scalar_lea.sflag [#allocation3], %s339
          %s341 = sand.u32 %s140, 1
          %s342 = smul.addr %s341, 8
          %s343 = scalar_lea.vmem [#allocation2], %s342
          %344 = dma.done %s340, 128
        $region48: #{tpu_custom_call.1} parent=43 // pred_fallthru
          _
      $region44: #{tpu_custom_call.1} parent=5 // pred_fallthru
        _
    $region6: #{tpu_custom_call.1} parent=1 // loop_footer
      %s17 = sadd.s32 1, %s13
    $region7: #{tpu_custom_call.1} parent=1 // loop_footer_branch
      %12 = sbr.rel target = $region3
    $region8: #{tpu_custom_call.1} parent=1 // loop_exit
      _
    %345 = vsyncpa [#allocation3], 1
    %s346 = scalar_lea.sflag [#allocation3], 1
    %347 = vsyncpa %s346, 1

</llo_original>
